<compile_context>
chip_gen: v6e
topology: v6e:2x2x1
jax: 0.10.0
libtpu: 0.0.40
codegen_flags: <defaults>
</compile_context>

<pallas_src>
import jax
import jax.numpy as jnp
from jax.experimental import pallas as pl
from jax.experimental.pallas import tpu as pltpu

CANVAS = 128

# (row_offset, col_offset) exactly as implied by the torch F.pad calls:
#   left_eye : pad (76, ..., 38, ...) -> row 38, col 76
#   right_eye: pad (21, ..., 38, ...) -> row 38, col 21
#   nose     : pad (47, ..., 37, ...) -> row 37, col 47
#   mouth    : pad (42, ..., 86, ...) -> row 86, col 42
OFFSETS = ((38, 76), (38, 21), (37, 47), (86, 42))

# NOTE: the module has no learnable parameters, so nothing to initialize.


def _overlaps(a, b):
    r0, c0, h0, w0 = a
    r1, c1, h1, w1 = b
    return not (r0 + h0 <= r1 or r1 + h1 <= r0 or c0 + w0 <= c1 or c1 + w1 <= c0)


def _make_kernel(plan):
    """plan: per part, static (row, col, height, width, needs_rmw)."""

    def kernel(le_ref, re_ref, no_ref, mo_ref, out_ref):
        # Zero the whole output block once; zero is the pad value.
        out_ref[...] = jnp.zeros_like(out_ref)
        refs = (le_ref, re_ref, no_ref, mo_ref)
        for ref, (r, c, h, w, needs_rmw) in zip(refs, plan):
            val = ref[...]
            if needs_rmw:
                # Region may already hold another part's data: RMW max.
                region = out_ref[:, pl.ds(r, h), pl.ds(c, w)]
                out_ref[:, pl.ds(r, h), pl.ds(c, w)] = jnp.maximum(region, val)
            else:
                # Region is still all zeros: store max(part, 0) directly, no load.
                out_ref[:, pl.ds(r, h), pl.ds(c, w)] = (
                    jnp.maximum(val, 0).astype(out_ref.dtype))

    return kernel


def local_fuser(left_eye, right_eye, nose, mouth, *, tn=64, align_rows=True,
                vmem_limit_bytes=None):
    """Pallas implementation of LocalFuser.forward (NCHW in, NCHW out).

    tn: canvases fused per grid step.  Tune per chip: v5e/v6e ~32-64,
        v7x ~64-128 (v7x has 64 MiB VMEM/TC; keep 2*tn*(64 KiB out + part
        bytes) under the scoped VMEM limit or pass vmem_limit_bytes).
    align_rows: zero-pad part rows so canvas row offsets/heights are multiples
        of 8 (removes sublane-masked stores/XLU rotations in the kernel).
    """
    parts = (left_eye, right_eye, nose, mouth)
    dtype = left_eye.dtype
    assert all(p.dtype == dtype for p in parts), "all parts must share a dtype"
    assert all(p.shape[:2] == left_eye.shape[:2] for p in parts), \
        "all parts must share (batch, channels)"
    B, C = left_eye.shape[:2]
    N = B * C

    # Static fit checks: VMEM sub-region stores have no runtime bounds check,
    # so an oversized part would silently corrupt VMEM or fault the chip.
    for p, (r, c) in zip(parts, OFFSETS):
        h, w = p.shape[-2:]
        assert r + h <= CANVAS and c + w <= CANVAS, (
            f"part of shape ({h},{w}) at offset ({r},{c}) does not fit inside "
            f"the {CANVAS}x{CANVAS} canvas")

    # ---- choose per-step block size (keep >= 2 grid steps for v7x megacore)
    tn = max(1, int(tn))
    if N < 2 * tn:
        tn = max(1, -(-N // 2))  # ceil(N/2)
    n_blocks = pl.cdiv(N, tn)

    # ---- flatten batch*channel (free reshape) and build the static store plan
    flat = []
    plan = []
    covered = []
    for p, (r, c) in zip(parts, OFFSETS):
        h, w = p.shape[-2:]
        f = p.reshape(N, h, w)  # metadata-only reshape
        if align_rows:
            r_al = (r // 8) * 8
            top = r - r_al
            h_al = -(-(top + h) // 8) * 8     # round up to sublane multiple
            bot = h_al - top - h              # always fits: r_al + h_al <= 128
            if top or bot:
                f = jnp.pad(f, ((0, 0), (top, bot), (0, 0)))
            r, h = r_al, h_al
        region = (r, c, h, w)
        needs_rmw = any(_overlaps(region, prev) for prev in covered)
        covered.append(region)
        plan.append((r, c, h, w, needs_rmw))
        flat.append(f)

    in_specs = [
        pl.BlockSpec((tn,) + f.shape[-2:], lambda i: (i, 0, 0)) for f in flat
    ]
    out_spec = pl.BlockSpec((tn, CANVAS, CANVAS), lambda i: (i, 0, 0))

    out = pl.pallas_call(
        _make_kernel(tuple(plan)),
        # Ragged tail handled natively: OOB output rows of the last block are
        # dropped; garbage tail reads only feed dropped rows.
        out_shape=jax.ShapeDtypeStruct((N, CANVAS, CANVAS), dtype),
        grid_spec=pltpu.PrefetchScalarGridSpec(
            num_scalar_prefetch=0,
            grid=(n_blocks,),
            in_specs=in_specs,
            out_specs=out_spec,
        ),
        compiler_params=pltpu.CompilerParams(
            dimension_semantics=("parallel",),
            vmem_limit_bytes=vmem_limit_bytes,
        ),
    )(*flat)

    return out.reshape(B, C, CANVAS, CANVAS)


def local_fuser_ref(left_eye, right_eye, nose, mouth):
    """Pure-JAX reference mirroring the torch code (for correctness check)."""
    def pad_to_canvas(x, r, c):
        H, W = x.shape[-2:]
        return jnp.pad(
            x, ((0, 0), (0, 0), (r, CANVAS - (r + H)), (c, CANVAS - (c + W))))

    stacked = jnp.stack(
        [pad_to_canvas(p, r, c)
         for p, (r, c) in zip((left_eye, right_eye, nose, mouth), OFFSETS)],
        axis=0)
    return jnp.max(stacked, axis=0)


if __name__ == "__main__":
    key = jax.random.PRNGKey(0)
    k_le, k_re, k_no, k_mo = jax.random.split(key, 4)

    B, C = 2, 4
    # small face-part crops (must fit inside the 128x128 canvas at the offsets)
    left_eye = jax.random.normal(k_le, (B, C, 32, 32), dtype=jnp.float32)
    right_eye = jax.random.normal(k_re, (B, C, 32, 32), dtype=jnp.float32)
    nose = jax.random.normal(k_no, (B, C, 32, 32), dtype=jnp.float32)
    mouth = jax.random.normal(k_mo, (B, C, 32, 48), dtype=jnp.float32)

    ref = local_fuser_ref(left_eye, right_eye, nose, mouth)

    # Default path: big tn (clamped to ceil(N/2) -> 2 grid steps), aligned rows.
    out = jax.block_until_ready(local_fuser(left_eye, right_eye, nose, mouth))
    assert out.shape == (B, C, CANVAS, CANVAS), out.shape
    assert jnp.array_equal(out, ref), "mismatch vs reference (default path)"

    # Also exercise the ragged-tail block (N=8, tn=3 -> partial last block)
    # and the unaligned-row store path.
    out2 = jax.block_until_ready(
        local_fuser(left_eye, right_eye, nose, mouth, tn=3, align_rows=False))
    assert jnp.array_equal(out2, ref), "mismatch vs reference (ragged/unaligned)"

    print("KERNEL_OK")
</pallas_src>

<mosaic_0001>
module attributes {stable_mosaic.version = 11 : i64} {
  func.func @kernel(%arg0: i32, %arg1: memref<4x40x32xf32, #tpu.memory_space<vmem>>, %arg2: memref<4x40x32xf32, #tpu.memory_space<vmem>>, %arg3: memref<4x40x32xf32, #tpu.memory_space<vmem>>, %arg4: memref<4x40x48xf32, #tpu.memory_space<vmem>>, %arg5: memref<4x128x128xf32, #tpu.memory_space<vmem>>) attributes {dimension_semantics = [#tpu.dimension_semantics<parallel>], iteration_bounds = array<i64: 2>, scalar_prefetch = 0 : i64, scratch_operands = 0 : i64, tpu.core_type = #tpu.core_type<tc>, window_params = [{transform_indices = @transform_0, window_bounds = array<i64: 4, 40, 32>}, {transform_indices = @transform_1, window_bounds = array<i64: 4, 40, 32>}, {transform_indices = @transform_2, window_bounds = array<i64: 4, 40, 32>}, {transform_indices = @transform_3, window_bounds = array<i64: 4, 40, 48>}, {transform_indices = @transform_4, window_bounds = array<i64: 4, 128, 128>}]} {
    %cst = arith.constant 0.000000e+00 : f32
    %0 = vector.broadcast %cst : f32 to vector<4x128x128xf32>
    %c0 = arith.constant 0 : index
    %c0_0 = arith.constant 0 : index
    %c0_1 = arith.constant 0 : index
    %1 = vector.load %arg5[%c0, %c0_0, %c0_1] : memref<4x128x128xf32, #tpu.memory_space<vmem>>, vector<4x128x128xf32>
    tpu.vector_store %arg5[%c0, %c0_0, %c0_1], %0 {strides = array<i32>} : memref<4x128x128xf32, #tpu.memory_space<vmem>>, vector<4x128x128xf32>,
    %c0_2 = arith.constant 0 : index
    %c0_3 = arith.constant 0 : index
    %c0_4 = arith.constant 0 : index
    %2 = vector.load %arg1[%c0_2, %c0_3, %c0_4] : memref<4x40x32xf32, #tpu.memory_space<vmem>>, vector<4x40x32xf32>
    %cst_5 = arith.constant 0.000000e+00 : f32
    %3 = vector.broadcast %cst_5 : f32 to vector<4x40x32xf32>
    %4 = arith.maximumf %2, %3 : vector<4x40x32xf32>
    %c0_6 = arith.constant 0 : index
    %c32 = arith.constant 32 : index
    %c76 = arith.constant 76 : index
    %5 = vector.load %arg5[%c0_6, %c32, %c76] : memref<4x128x128xf32, #tpu.memory_space<vmem>>, vector<4x40x32xf32>
    tpu.vector_store %arg5[%c0_6, %c32, %c76], %4 {strides = array<i32>} : memref<4x128x128xf32, #tpu.memory_space<vmem>>, vector<4x40x32xf32>,
    %c0_7 = arith.constant 0 : index
    %c0_8 = arith.constant 0 : index
    %c0_9 = arith.constant 0 : index
    %6 = vector.load %arg2[%c0_7, %c0_8, %c0_9] : memref<4x40x32xf32, #tpu.memory_space<vmem>>, vector<4x40x32xf32>
    %cst_10 = arith.constant 0.000000e+00 : f32
    %7 = vector.broadcast %cst_10 : f32 to vector<4x40x32xf32>
    %8 = arith.maximumf %6, %7 : vector<4x40x32xf32>
    %c0_11 = arith.constant 0 : index
    %c32_12 = arith.constant 32 : index
    %c21 = arith.constant 21 : index
    %9 = vector.load %arg5[%c0_11, %c32_12, %c21] : memref<4x128x128xf32, #tpu.memory_space<vmem>>, vector<4x40x32xf32>
    tpu.vector_store %arg5[%c0_11, %c32_12, %c21], %8 {strides = array<i32>} : memref<4x128x128xf32, #tpu.memory_space<vmem>>, vector<4x40x32xf32>,
    %c0_13 = arith.constant 0 : index
    %c0_14 = arith.constant 0 : index
    %c0_15 = arith.constant 0 : index
    %10 = vector.load %arg3[%c0_13, %c0_14, %c0_15] : memref<4x40x32xf32, #tpu.memory_space<vmem>>, vector<4x40x32xf32>
    %c0_16 = arith.constant 0 : index
    %c32_17 = arith.constant 32 : index
    %c47 = arith.constant 47 : index
    %11 = vector.load %arg5[%c0_16, %c32_17, %c47] : memref<4x128x128xf32, #tpu.memory_space<vmem>>, vector<4x40x32xf32>
    %12 = arith.maximumf %11, %10 : vector<4x40x32xf32>
    %c0_18 = arith.constant 0 : index
    %c32_19 = arith.constant 32 : index
    %c47_20 = arith.constant 47 : index
    %13 = vector.load %arg5[%c0_18, %c32_19, %c47_20] : memref<4x128x128xf32, #tpu.memory_space<vmem>>, vector<4x40x32xf32>
    tpu.vector_store %arg5[%c0_18, %c32_19, %c47_20], %12 {strides = array<i32>} : memref<4x128x128xf32, #tpu.memory_space<vmem>>, vector<4x40x32xf32>,
    %c0_21 = arith.constant 0 : index
    %c0_22 = arith.constant 0 : index
    %c0_23 = arith.constant 0 : index
    %14 = vector.load %arg4[%c0_21, %c0_22, %c0_23] : memref<4x40x48xf32, #tpu.memory_space<vmem>>, vector<4x40x48xf32>
    %cst_24 = arith.constant 0.000000e+00 : f32
    %15 = vector.broadcast %cst_24 : f32 to vector<4x40x48xf32>
    %16 = arith.maximumf %14, %15 : vector<4x40x48xf32>
    %c0_25 = arith.constant 0 : index
    %c80 = arith.constant 80 : index
    %c42 = arith.constant 42 : index
    %17 = vector.load %arg5[%c0_25, %c80, %c42] : memref<4x128x128xf32, #tpu.memory_space<vmem>>, vector<4x40x48xf32>
    tpu.vector_store %arg5[%c0_25, %c80, %c42], %16 {strides = array<i32>} : memref<4x128x128xf32, #tpu.memory_space<vmem>>, vector<4x40x48xf32>,
    return
  }
  func.func @transform_0(%arg0: i32) -> (i32, i32, i32) {
    %c0_i32 = arith.constant 0 : i32
    %c0_i32_0 = arith.constant 0 : i32
    %c0_i32_1 = arith.constant 0 : i32
    return %arg0, %c0_i32, %c0_i32_0 : i32, i32, i32
  }
  func.func @transform_1(%arg0: i32) -> (i32, i32, i32) {
    %c0_i32 = arith.constant 0 : i32
    %c0_i32_0 = arith.constant 0 : i32
    %c0_i32_1 = arith.constant 0 : i32
    return %arg0, %c0_i32, %c0_i32_0 : i32, i32, i32
  }
  func.func @transform_2(%arg0: i32) -> (i32, i32, i32) {
    %c0_i32 = arith.constant 0 : i32
    %c0_i32_0 = arith.constant 0 : i32
    %c0_i32_1 = arith.constant 0 : i32
    return %arg0, %c0_i32, %c0_i32_0 : i32, i32, i32
  }
  func.func @transform_3(%arg0: i32) -> (i32, i32, i32) {
    %c0_i32 = arith.constant 0 : i32
    %c0_i32_0 = arith.constant 0 : i32
    %c0_i32_1 = arith.constant 0 : i32
    return %arg0, %c0_i32, %c0_i32_0 : i32, i32, i32
  }
  func.func @transform_4(%arg0: i32) -> (i32, i32, i32) {
    %c0_i32 = arith.constant 0 : i32
    %c0_i32_0 = arith.constant 0 : i32
    %c0_i32_1 = arith.constant 0 : i32
    return %arg0, %c0_i32, %c0_i32_0 : i32, i32, i32
  }
}

</mosaic_0001>

<llo_original>
// kernel: tpu_custom_call.1
$region0: #{tpu_custom_call.1}
  #allocation0 [shape = 'u32[]', space=smem, size = 0x4, offset = 0x4, fixed_abs, tag = 'smem constant byte address 0x4 - core index']
  #allocation1 [shape = 'u32[144,128]{1,0:T(1,128)}', space=vmem, size = 0x12000, scoped, tag = 'internal scratch']
  %s0 = inlined_call_operand.vmem [shape: f32[8,40,32], index: 0, kind: input, shape index: {}]
  %s1 = inlined_call_operand.vmem [shape: f32[8,40,32], index: 1, kind: input, shape index: {}]
  %s2 = inlined_call_operand.vmem [shape: f32[8,40,32], index: 2, kind: input, shape index: {}]
  %s3 = inlined_call_operand.vmem [shape: f32[8,40,48], index: 3, kind: input, shape index: {}]
  %s4 = inlined_call_operand.hbm [shape: f32[8,128,128], index: 4, kind: output, shape index: {}]
  %s5 = sld [smem:[#allocation0]]
  $region49: #{tpu_custom_call.1} parent=0
    _
  %s7 = ssub.s32 1, %s5
  %s8 = scalar_select 0, %s7, %s5
  $region1: #{tpu_custom_call.1} parent=0
    #allocation2 [shape = 'u8[524288]{0}', space=vmem, size = 0x80000, scoped, tag = 'output window, operand 0']
    #allocation3 [shape = 's32[2]{0}', space=sflag, size = 0x8, scoped, tag = 'scoped memory for tpu_custom_call.1']
    %9 = vsyncpa [#allocation3], 0
    %s10 = scalar_lea.sflag [#allocation3], 1
    %11 = vsyncpa %s10, 0
    loop: start=0, step=1, limit=4
    $region2: #{tpu_custom_call.1} parent=1 // loop_pre_header
      _
    $region3: #{tpu_custom_call.1} parent=1 // loop_header
      %s13 = sphi 0, %s17
      %p14 = scmp.ge.s32.totalorder %s13, 4
      %s23 = sphi 0, %s25
      %s26 = sphi 0, %s23
      %s27 = sphi 0, %s26
      %s43 = sphi 0, %s27
      %s49 = sphi 0, %s51
      %s52 = sphi 0, %s49
      %s53 = sphi 0, %s52
      %s69 = sphi 0, %s53
      %s75 = sphi 0, %s77
      %s78 = sphi 0, %s75
      %s79 = sphi 0, %s78
      %s95 = sphi 0, %s79
      %s101 = sphi 0, %s103
      %s104 = sphi 0, %s101
      %s105 = sphi 0, %s104
      %s121 = sphi 0, %s105
      %s127 = sphi 0, %s129
      %s130 = sphi 0, %s127
      %s131 = sphi 0, %s130
      %s147 = sphi 0, %s131
    $region4: #{tpu_custom_call.1} parent=1 // loop_header_branch
      %16 = sbr.rel (%p14) target = $region8
    $region5: #{tpu_custom_call.1} parent=1 // loop_body
      %s18 = ssub.s32 %s13, 1
      %s19 = ssub.s32 %s13, 2
      %s20 = sadd.s32 %s13, 1
      %s21 = ssub.s32 %s13, %s20
      %p22 = scmp.eq.s32.totalorder %s21, 0
      %s24 = sadd.s32 %s23, 1
      %s25 = scalar_select %p22, %s23, %s24
      %p28 = pneg %p22
      %p29 = scmp.eq.s32.totalorder %s13, 1
      %p30 = por %p28, %p29
      %p31 = scmp.ne.s32.totalorder %s23, %s26
      %p32 = scmp.eq.s32.totalorder %s13, 0
      %p33 = por %p31, %p32
      %p34 = scmp.ne.s32.totalorder %s23, %s26
      %p35 = scmp.eq.s32.totalorder %s18, 1
      %p36 = por %p34, %p35
      %p37 = scmp.ne.s32.totalorder %s26, %s27
      %p38 = scmp.eq.s32.totalorder %s18, 0
      %p39 = por %p37, %p38
      %p40 = scmp.ne.s32.totalorder %s26, %s27
      %p41 = scmp.eq.s32.totalorder %s19, 1
      %p42 = por %p40, %p41
      %p44 = scmp.ne.s32.totalorder %s27, %s43
      %p45 = scmp.eq.s32.totalorder %s19, 0
      %p46 = por %p44, %p45
      %s47 = ssub.s32 %s13, %s20
      %p48 = scmp.eq.s32.totalorder %s47, 0
      %s50 = sadd.s32 %s49, 1
      %s51 = scalar_select %p48, %s49, %s50
      %p54 = pneg %p48
      %p55 = scmp.eq.s32.totalorder %s13, 1
      %p56 = por %p54, %p55
      %p57 = scmp.ne.s32.totalorder %s49, %s52
      %p58 = scmp.eq.s32.totalorder %s13, 0
      %p59 = por %p57, %p58
      %p60 = scmp.ne.s32.totalorder %s49, %s52
      %p61 = scmp.eq.s32.totalorder %s18, 1
      %p62 = por %p60, %p61
      %p63 = scmp.ne.s32.totalorder %s52, %s53
      %p64 = scmp.eq.s32.totalorder %s18, 0
      %p65 = por %p63, %p64
      %p66 = scmp.ne.s32.totalorder %s52, %s53
      %p67 = scmp.eq.s32.totalorder %s19, 1
      %p68 = por %p66, %p67
      %p70 = scmp.ne.s32.totalorder %s53, %s69
      %p71 = scmp.eq.s32.totalorder %s19, 0
      %p72 = por %p70, %p71
      %s73 = ssub.s32 %s13, %s20
      %p74 = scmp.eq.s32.totalorder %s73, 0
      %s76 = sadd.s32 %s75, 1
      %s77 = scalar_select %p74, %s75, %s76
      %p80 = pneg %p74
      %p81 = scmp.eq.s32.totalorder %s13, 1
      %p82 = por %p80, %p81
      %p83 = scmp.ne.s32.totalorder %s75, %s78
      %p84 = scmp.eq.s32.totalorder %s13, 0
      %p85 = por %p83, %p84
      %p86 = scmp.ne.s32.totalorder %s75, %s78
      %p87 = scmp.eq.s32.totalorder %s18, 1
      %p88 = por %p86, %p87
      %p89 = scmp.ne.s32.totalorder %s78, %s79
      %p90 = scmp.eq.s32.totalorder %s18, 0
      %p91 = por %p89, %p90
      %p92 = scmp.ne.s32.totalorder %s78, %s79
      %p93 = scmp.eq.s32.totalorder %s19, 1
      %p94 = por %p92, %p93
      %p96 = scmp.ne.s32.totalorder %s79, %s95
      %p97 = scmp.eq.s32.totalorder %s19, 0
      %p98 = por %p96, %p97
      %s99 = ssub.s32 %s13, %s20
      %p100 = scmp.eq.s32.totalorder %s99, 0
      %s102 = sadd.s32 %s101, 1
      %s103 = scalar_select %p100, %s101, %s102
      %p106 = pneg %p100
      %p107 = scmp.eq.s32.totalorder %s13, 1
      %p108 = por %p106, %p107
      %p109 = scmp.ne.s32.totalorder %s101, %s104
      %p110 = scmp.eq.s32.totalorder %s13, 0
      %p111 = por %p109, %p110
      %p112 = scmp.ne.s32.totalorder %s101, %s104
      %p113 = scmp.eq.s32.totalorder %s18, 1
      %p114 = por %p112, %p113
      %p115 = scmp.ne.s32.totalorder %s104, %s105
      %p116 = scmp.eq.s32.totalorder %s18, 0
      %p117 = por %p115, %p116
      %p118 = scmp.ne.s32.totalorder %s104, %s105
      %p119 = scmp.eq.s32.totalorder %s19, 1
      %p120 = por %p118, %p119
      %p122 = scmp.ne.s32.totalorder %s105, %s121
      %p123 = scmp.eq.s32.totalorder %s19, 0
      %p124 = por %p122, %p123
      %s125 = ssub.s32 %s13, %s20
      %p126 = scmp.eq.s32.totalorder %s125, 0
      %s128 = sadd.s32 %s127, 1
      %s129 = scalar_select %p126, %s127, %s128
      %p132 = pneg %p126
      %p133 = scmp.eq.s32.totalorder %s13, 1
      %p134 = por %p132, %p133
      %p135 = scmp.ne.s32.totalorder %s127, %s130
      %p136 = scmp.eq.s32.totalorder %s13, 0
      %p137 = por %p135, %p136
      %p138 = scmp.ne.s32.totalorder %s127, %s130
      %p139 = scmp.eq.s32.totalorder %s18, 1
      %p140 = por %p138, %p139
      %p141 = scmp.ne.s32.totalorder %s130, %s131
      %p142 = scmp.eq.s32.totalorder %s18, 0
      %p143 = por %p141, %p142
      %p144 = scmp.ne.s32.totalorder %s130, %s131
      %p145 = scmp.eq.s32.totalorder %s19, 1
      %p146 = por %p144, %p145
      %p148 = scmp.ne.s32.totalorder %s131, %s147
      %p149 = scmp.eq.s32.totalorder %s19, 0
      %p150 = por %p148, %p149
      %p151 = scmp.le.s32.totalorder 1, %s13
      %p152 = scmp.lt.s32.totalorder %s13, 3
      %p153 = pnand %p151, %p152
      %p154 = pneg %p153
      // Predicated region
      $region9: #{tpu_custom_call.1} parent=5 // pred_check
        _
      $region10: #{tpu_custom_call.1} parent=5 // pred_check_branch
        %156 = sbr.rel (%p153) target = $region12
      $region11: #{tpu_custom_call.1} parent=5 // pred_region
        %s157 = ssub.s32 %s13, 1
      $region12: #{tpu_custom_call.1} parent=5 // pred_fallthru
        _
      %p158 = scmp.lt.s32.totalorder %s13, 2
      // Predicated region
      $region13: #{tpu_custom_call.1} parent=5 // pred_check
        %p159 = pneg %p158
      $region14: #{tpu_custom_call.1} parent=5 // pred_check_branch
        %161 = sbr.rel (%p159) target = $region16
      $region15: #{tpu_custom_call.1} parent=5 // pred_region
        // Predicated region
        $region17: #{tpu_custom_call.1} parent=15 // pred_check
          %p162 = pneg %p33
        $region18: #{tpu_custom_call.1} parent=15 // pred_check_branch
          %164 = sbr.rel (%p162) target = $region20
        $region19: #{tpu_custom_call.1} parent=15 // pred_region
          %s165 = smul.u32 4, %s13
          %p166 = scmp.lt.s32.totalorder %s165, 7
          %s167 = scalar_select %p166, %s165, 7
          %s168 = smul.addr %s167, 5
          %s169 = smul.addr %s168, 8
          %s170 = scalar_lea.vmem %s0, %s169
          %s171 = smul.u32 4, %s13
        $region20: #{tpu_custom_call.1} parent=15 // pred_fallthru
          _
        // Predicated region
        $region21: #{tpu_custom_call.1} parent=15 // pred_check
          %p172 = pneg %p59
        $region22: #{tpu_custom_call.1} parent=15 // pred_check_branch
          %174 = sbr.rel (%p172) target = $region24
        $region23: #{tpu_custom_call.1} parent=15 // pred_region
          %s175 = smul.u32 4, %s13
          %p176 = scmp.lt.s32.totalorder %s175, 7
          %s177 = scalar_select %p176, %s175, 7
          %s178 = smul.addr %s177, 5
          %s179 = smul.addr %s178, 8
          %s180 = scalar_lea.vmem %s1, %s179
          %s181 = smul.u32 4, %s13
        $region24: #{tpu_custom_call.1} parent=15 // pred_fallthru
          _
        // Predicated region
        $region25: #{tpu_custom_call.1} parent=15 // pred_check
          %p182 = pneg %p85
        $region26: #{tpu_custom_call.1} parent=15 // pred_check_branch
          %184 = sbr.rel (%p182) target = $region28
        $region27: #{tpu_custom_call.1} parent=15 // pred_region
          %s185 = smul.u32 4, %s13
          %p186 = scmp.lt.s32.totalorder %s185, 7
          %s187 = scalar_select %p186, %s185, 7
          %s188 = smul.addr %s187, 5
          %s189 = smul.addr %s188, 8
          %s190 = scalar_lea.vmem %s2, %s189
          %s191 = smul.u32 4, %s13
        $region28: #{tpu_custom_call.1} parent=15 // pred_fallthru
          _
        // Predicated region
        $region29: #{tpu_custom_call.1} parent=15 // pred_check
          %p192 = pneg %p111
        $region30: #{tpu_custom_call.1} parent=15 // pred_check_branch
          %194 = sbr.rel (%p192) target = $region32
        $region31: #{tpu_custom_call.1} parent=15 // pred_region
          %s195 = smul.u32 4, %s13
          %p196 = scmp.lt.s32.totalorder %s195, 7
          %s197 = scalar_select %p196, %s195, 7
          %s198 = smul.addr %s197, 5
          %s199 = smul.addr %s198, 8
          %s200 = scalar_lea.vmem %s3, %s199
          %s201 = smul.u32 4, %s13
        $region32: #{tpu_custom_call.1} parent=15 // pred_fallthru
          _
      $region16: #{tpu_custom_call.1} parent=5 // pred_fallthru
        _
      %p202 = scmp.le.s32.totalorder 1, %s13
      %p203 = scmp.lt.s32.totalorder %s13, 3
      %p204 = pnand %p202, %p203
      %p205 = pneg %p204
      // Predicated region
      $region33: #{tpu_custom_call.1} parent=5 // pred_check
        _
      $region34: #{tpu_custom_call.1} parent=5 // pred_check_branch
        %207 = sbr.rel (%p204) target = $region36
      $region35: #{tpu_custom_call.1} parent=5 // pred_region
        %s208 = ssub.s32 %s13, 1
        %s209 = smul.u32 4, %s18
        %p210 = scmp.lt.s32.totalorder %s209, 7
        %s211 = scalar_select %p210, %s209, 7
        %s212 = smul.addr %s211, 5
        %s213 = smul.addr %s212, 8
        %s214 = scalar_lea.vmem %s0, %s213
        %p215 = pneg %p39
        %p216 = pneg %p36
        %s217 = smul.u32 4, %s18
        %p218 = scmp.lt.s32.totalorder %s217, 7
        %s219 = scalar_select %p218, %s217, 7
        %s220 = smul.addr %s219, 5
        %s221 = smul.addr %s220, 8
        %s222 = scalar_lea.vmem %s1, %s221
        %p223 = pneg %p65
        %p224 = pneg %p62
        %s225 = smul.u32 4, %s18
        %p226 = scmp.lt.s32.totalorder %s225, 7
        %s227 = scalar_select %p226, %s225, 7
        %s228 = smul.addr %s227, 5
        %s229 = smul.addr %s228, 8
        %s230 = scalar_lea.vmem %s2, %s229
        %p231 = pneg %p91
        %p232 = pneg %p88
        %s233 = smul.u32 4, %s18
        %p234 = scmp.lt.s32.totalorder %s233, 7
        %s235 = scalar_select %p234, %s233, 7
        %s236 = smul.addr %s235, 5
        %s237 = smul.addr %s236, 8
        %s238 = scalar_lea.vmem %s3, %s237
        %p239 = pneg %p117
        %p240 = pneg %p114
        %p241 = pneg %p143
        %p242 = pneg %p140
        %s243 = sand.u32 %s130, 1
        %s244 = scalar_lea.sflag [#allocation3], %s243
        %s245 = sand.u32 %s130, 1
        %s246 = smul.addr %s245, 512
        %s247 = scalar_lea.vmem [#allocation2], %s246
        %s248 = smul.u32 4, %s18
        %p249 = scmp.lt.s32.totalorder %s248, 7
        %s250 = scalar_select %p249, %s248, 7
        %s251 = smul.addr %s250, 5
        %s252 = smul.addr %s251, 8
        %s253 = scalar_lea.vmem %s0, %s252
        %s254 = smul.u32 4, %s18
        %s255 = smul.u32 4, %s18
        %p256 = scmp.lt.s32.totalorder %s255, 7
        %s257 = scalar_select %p256, %s255, 7
        %s258 = smul.addr %s257, 5
        %s259 = smul.addr %s258, 8
        %s260 = scalar_lea.vmem %s1, %s259
        %s261 = smul.u32 4, %s18
        %s262 = smul.u32 4, %s18
        %p263 = scmp.lt.s32.totalorder %s262, 7
        %s264 = scalar_select %p263, %s262, 7
        %s265 = smul.addr %s264, 5
        %s266 = smul.addr %s265, 8
        %s267 = scalar_lea.vmem %s2, %s266
        %s268 = smul.u32 4, %s18
        %s269 = smul.u32 4, %s18
        %p270 = scmp.lt.s32.totalorder %s269, 7
        %s271 = scalar_select %p270, %s269, 7
        %s272 = smul.addr %s271, 5
        %s273 = smul.addr %s272, 8
        %s274 = scalar_lea.vmem %s3, %s273
        %s275 = smul.u32 4, %s18
        %s276 = smul.u32 4, %s18
        %277 = vst [vmem:[%s247] sm:$0xff] 0.0
        %278 = vst [vmem:[%s247 + $0x8] sm:$0xff] 0.0
        %279 = vst [vmem:[%s247 + $0x10] sm:$0xff] 0.0
        %280 = vst [vmem:[%s247 + $0x18] sm:$0xff] 0.0
        %281 = vst [vmem:[%s247 + $0x20] sm:$0xff] 0.0
        %282 = vst [vmem:[%s247 + $0x28] sm:$0xff] 0.0
        %283 = vst [vmem:[%s247 + $0x30] sm:$0xff] 0.0
        %284 = vst [vmem:[%s247 + $0x38] sm:$0xff] 0.0
        %285 = vst [vmem:[%s247 + $0x40] sm:$0xff] 0.0
        %286 = vst [vmem:[%s247 + $0x48] sm:$0xff] 0.0
        %287 = vst [vmem:[%s247 + $0x50] sm:$0xff] 0.0
        %288 = vst [vmem:[%s247 + $0x58] sm:$0xff] 0.0
        %289 = vst [vmem:[%s247 + $0x60] sm:$0xff] 0.0
        %290 = vst [vmem:[%s247 + $0x68] sm:$0xff] 0.0
        %291 = vst [vmem:[%s247 + $0x70] sm:$0xff] 0.0
        %292 = vst [vmem:[%s247 + $0x78] sm:$0xff] 0.0
        %293 = vst [vmem:[%s247 + $0x80] sm:$0xff] 0.0
        %294 = vst [vmem:[%s247 + $0x88] sm:$0xff] 0.0
        %295 = vst [vmem:[%s247 + $0x90] sm:$0xff] 0.0
        %296 = vst [vmem:[%s247 + $0x98] sm:$0xff] 0.0
        %297 = vst [vmem:[%s247 + $0xa0] sm:$0xff] 0.0
        %298 = vst [vmem:[%s247 + $0xa8] sm:$0xff] 0.0
        %299 = vst [vmem:[%s247 + $0xb0] sm:$0xff] 0.0
        %300 = vst [vmem:[%s247 + $0xb8] sm:$0xff] 0.0
        %301 = vst [vmem:[%s247 + $0xc0] sm:$0xff] 0.0
        %302 = vst [vmem:[%s247 + $0xc8] sm:$0xff] 0.0
        %303 = vst [vmem:[%s247 + $0xd0] sm:$0xff] 0.0
        %304 = vst [vmem:[%s247 + $0xd8] sm:$0xff] 0.0
        %305 = vst [vmem:[%s247 + $0xe0] sm:$0xff] 0.0
        %306 = vst [vmem:[%s247 + $0xe8] sm:$0xff] 0.0
        %307 = vst [vmem:[%s247 + $0xf0] sm:$0xff] 0.0
        %308 = vst [vmem:[%s247 + $0xf8] sm:$0xff] 0.0
        %309 = vst [vmem:[%s247 + $0x100] sm:$0xff] 0.0
        %310 = vst [vmem:[%s247 + $0x108] sm:$0xff] 0.0
        %311 = vst [vmem:[%s247 + $0x110] sm:$0xff] 0.0
        %312 = vst [vmem:[%s247 + $0x118] sm:$0xff] 0.0
        %313 = vst [vmem:[%s247 + $0x120] sm:$0xff] 0.0
        %314 = vst [vmem:[%s247 + $0x128] sm:$0xff] 0.0
        %315 = vst [vmem:[%s247 + $0x130] sm:$0xff] 0.0
        %316 = vst [vmem:[%s247 + $0x138] sm:$0xff] 0.0
        %317 = vst [vmem:[%s247 + $0x140] sm:$0xff] 0.0
        %318 = vst [vmem:[%s247 + $0x148] sm:$0xff] 0.0
        %319 = vst [vmem:[%s247 + $0x150] sm:$0xff] 0.0
        %320 = vst [vmem:[%s247 + $0x158] sm:$0xff] 0.0
        %321 = vst [vmem:[%s247 + $0x160] sm:$0xff] 0.0
        %322 = vst [vmem:[%s247 + $0x168] sm:$0xff] 0.0
        %323 = vst [vmem:[%s247 + $0x170] sm:$0xff] 0.0
        %324 = vst [vmem:[%s247 + $0x178] sm:$0xff] 0.0
        %325 = vst [vmem:[%s247 + $0x180] sm:$0xff] 0.0
        %326 = vst [vmem:[%s247 + $0x188] sm:$0xff] 0.0
        %327 = vst [vmem:[%s247 + $0x190] sm:$0xff] 0.0
        %328 = vst [vmem:[%s247 + $0x198] sm:$0xff] 0.0
        %329 = vst [vmem:[%s247 + $0x1a0] sm:$0xff] 0.0
        %330 = vst [vmem:[%s247 + $0x1a8] sm:$0xff] 0.0
        %331 = vst [vmem:[%s247 + $0x1b0] sm:$0xff] 0.0
        %332 = vst [vmem:[%s247 + $0x1b8] sm:$0xff] 0.0
        %333 = vst [vmem:[%s247 + $0x1c0] sm:$0xff] 0.0
        %334 = vst [vmem:[%s247 + $0x1c8] sm:$0xff] 0.0
        %335 = vst [vmem:[%s247 + $0x1d0] sm:$0xff] 0.0
        %336 = vst [vmem:[%s247 + $0x1d8] sm:$0xff] 0.0
        %337 = vst [vmem:[%s247 + $0x1e0] sm:$0xff] 0.0
        %338 = vst [vmem:[%s247 + $0x1e8] sm:$0xff] 0.0
        %339 = vst [vmem:[%s247 + $0x1f0] sm:$0xff] 0.0
        %340 = vst [vmem:[%s247 + $0x1f8] sm:$0xff] 0.0
        %v341 = vld [vmem:[%s253] sm:$0xff]
        %v342 = vld [vmem:[%s253 + $0x8] sm:$0xff]
        %v343 = vld [vmem:[%s253 + $0x10] sm:$0xff]
        %v344 = vld [vmem:[%s253 + $0x18] sm:$0xff]
        %v345 = vld [vmem:[%s253 + $0x20] sm:$0xff]
        %v346 = vld [vmem:[%s253 + $0x28] sm:$0xff]
        %v347 = vld [vmem:[%s253 + $0x30] sm:$0xff]
        %v348 = vld [vmem:[%s253 + $0x38] sm:$0xff]
        %v349 = vld [vmem:[%s253 + $0x40] sm:$0xff]
        %v350 = vld [vmem:[%s253 + $0x48] sm:$0xff]
        %v351 = vld [vmem:[%s253 + $0x50] sm:$0xff]
        %v352 = vld [vmem:[%s253 + $0x58] sm:$0xff]
        %v353 = vld [vmem:[%s253 + $0x60] sm:$0xff]
        %v354 = vld [vmem:[%s253 + $0x68] sm:$0xff]
        %v355 = vld [vmem:[%s253 + $0x70] sm:$0xff]
        %v356 = vld [vmem:[%s253 + $0x78] sm:$0xff]
        %v357 = vld [vmem:[%s253 + $0x80] sm:$0xff]
        %v358 = vld [vmem:[%s253 + $0x88] sm:$0xff]
        %v359 = vld [vmem:[%s253 + $0x90] sm:$0xff]
        %v360 = vld [vmem:[%s253 + $0x98] sm:$0xff]
        %v361 = vmax.f32 %v341, 0.0
        %v362 = vmax.f32 %v342, 0.0
        %v363 = vmax.f32 %v343, 0.0
        %v364 = vmax.f32 %v344, 0.0
        %v365 = vmax.f32 %v345, 0.0
        %v366 = vmax.f32 %v346, 0.0
        %v367 = vmax.f32 %v347, 0.0
        %v368 = vmax.f32 %v348, 0.0
        %v369 = vmax.f32 %v349, 0.0
        %v370 = vmax.f32 %v350, 0.0
        %v371 = vmax.f32 %v351, 0.0
        %v372 = vmax.f32 %v352, 0.0
        %v373 = vmax.f32 %v353, 0.0
        %v374 = vmax.f32 %v354, 0.0
        %v375 = vmax.f32 %v355, 0.0
        %v376 = vmax.f32 %v356, 0.0
        %v377 = vmax.f32 %v357, 0.0
        %v378 = vmax.f32 %v358, 0.0
        %v379 = vmax.f32 %v359, 0.0
        %v380 = vmax.f32 %v360, 0.0
        %401 = vrot.lane.b32.xlu0 %v361, 76
        %v402 = vpop.permute.xlu0 %401
        %403 = vrot.lane.b32.xlu0 %v362, 76
        %v404 = vpop.permute.xlu0 %403
        %405 = vrot.lane.b32.xlu0 %v363, 76
        %v406 = vpop.permute.xlu0 %405
        %407 = vrot.lane.b32.xlu0 %v364, 76
        %v408 = vpop.permute.xlu0 %407
        %409 = vrot.lane.b32.xlu0 %v365, 76
        %v410 = vpop.permute.xlu0 %409
        %411 = vrot.lane.b32.xlu0 %v366, 76
        %v412 = vpop.permute.xlu0 %411
        %413 = vrot.lane.b32.xlu0 %v367, 76
        %v414 = vpop.permute.xlu0 %413
        %415 = vrot.lane.b32.xlu0 %v368, 76
        %v416 = vpop.permute.xlu0 %415
        %417 = vrot.lane.b32.xlu0 %v369, 76
        %v418 = vpop.permute.xlu0 %417
        %419 = vrot.lane.b32.xlu0 %v370, 76
        %v420 = vpop.permute.xlu0 %419
        %421 = vrot.lane.b32.xlu0 %v371, 76
        %v422 = vpop.permute.xlu0 %421
        %423 = vrot.lane.b32.xlu0 %v372, 76
        %v424 = vpop.permute.xlu0 %423
        %425 = vrot.lane.b32.xlu0 %v373, 76
        %v426 = vpop.permute.xlu0 %425
        %427 = vrot.lane.b32.xlu0 %v374, 76
        %v428 = vpop.permute.xlu0 %427
        %429 = vrot.lane.b32.xlu0 %v375, 76
        %v430 = vpop.permute.xlu0 %429
        %431 = vrot.lane.b32.xlu0 %v376, 76
        %v432 = vpop.permute.xlu0 %431
        %433 = vrot.lane.b32.xlu0 %v377, 76
        %v434 = vpop.permute.xlu0 %433
        %435 = vrot.lane.b32.xlu0 %v378, 76
        %v436 = vpop.permute.xlu0 %435
        %437 = vrot.lane.b32.xlu0 %v379, 76
        %v438 = vpop.permute.xlu0 %437
        %439 = vrot.lane.b32.xlu0 %v380, 76
        %v440 = vpop.permute.xlu0 %439
        %vm461 = vcmask 884320
        %462 = vst.msk [vmem:[%s247 + $0x20] sm:$0xff] %vm461, %v402
        %463 = vst.msk [vmem:[%s247 + $0x28] sm:$0xff] %vm461, %v404
        %464 = vst.msk [vmem:[%s247 + $0x30] sm:$0xff] %vm461, %v406
        %465 = vst.msk [vmem:[%s247 + $0x38] sm:$0xff] %vm461, %v408
        %466 = vst.msk [vmem:[%s247 + $0x40] sm:$0xff] %vm461, %v410
        %467 = vst.msk [vmem:[%s247 + $0xa0] sm:$0xff] %vm461, %v412
        %468 = vst.msk [vmem:[%s247 + $0xa8] sm:$0xff] %vm461, %v414
        %469 = vst.msk [vmem:[%s247 + $0xb0] sm:$0xff] %vm461, %v416
        %470 = vst.msk [vmem:[%s247 + $0xb8] sm:$0xff] %vm461, %v418
        %471 = vst.msk [vmem:[%s247 + $0xc0] sm:$0xff] %vm461, %v420
        %472 = vst.msk [vmem:[%s247 + $0x120] sm:$0xff] %vm461, %v422
        %473 = vst.msk [vmem:[%s247 + $0x128] sm:$0xff] %vm461, %v424
        %474 = vst.msk [vmem:[%s247 + $0x130] sm:$0xff] %vm461, %v426
        %475 = vst.msk [vmem:[%s247 + $0x138] sm:$0xff] %vm461, %v428
        %476 = vst.msk [vmem:[%s247 + $0x140] sm:$0xff] %vm461, %v430
        %477 = vst.msk [vmem:[%s247 + $0x1a0] sm:$0xff] %vm461, %v432
        %478 = vst.msk [vmem:[%s247 + $0x1a8] sm:$0xff] %vm461, %v434
        %479 = vst.msk [vmem:[%s247 + $0x1b0] sm:$0xff] %vm461, %v436
        %480 = vst.msk [vmem:[%s247 + $0x1b8] sm:$0xff] %vm461, %v438
        %481 = vst.msk [vmem:[%s247 + $0x1c0] sm:$0xff] %vm461, %v440
        %v482 = vld [vmem:[%s260] sm:$0xff]
        %v483 = vld [vmem:[%s260 + $0x8] sm:$0xff]
        %v484 = vld [vmem:[%s260 + $0x10] sm:$0xff]
        %v485 = vld [vmem:[%s260 + $0x18] sm:$0xff]
        %v486 = vld [vmem:[%s260 + $0x20] sm:$0xff]
        %v487 = vld [vmem:[%s260 + $0x28] sm:$0xff]
        %v488 = vld [vmem:[%s260 + $0x30] sm:$0xff]
        %v489 = vld [vmem:[%s260 + $0x38] sm:$0xff]
        %v490 = vld [vmem:[%s260 + $0x40] sm:$0xff]
        %v491 = vld [vmem:[%s260 + $0x48] sm:$0xff]
        %v492 = vld [vmem:[%s260 + $0x50] sm:$0xff]
        %v493 = vld [vmem:[%s260 + $0x58] sm:$0xff]
        %v494 = vld [vmem:[%s260 + $0x60] sm:$0xff]
        %v495 = vld [vmem:[%s260 + $0x68] sm:$0xff]
        %v496 = vld [vmem:[%s260 + $0x70] sm:$0xff]
        %v497 = vld [vmem:[%s260 + $0x78] sm:$0xff]
        %v498 = vld [vmem:[%s260 + $0x80] sm:$0xff]
        %v499 = vld [vmem:[%s260 + $0x88] sm:$0xff]
        %v500 = vld [vmem:[%s260 + $0x90] sm:$0xff]
        %v501 = vld [vmem:[%s260 + $0x98] sm:$0xff]
        %v502 = vmax.f32 %v482, 0.0
        %v503 = vmax.f32 %v483, 0.0
        %v504 = vmax.f32 %v484, 0.0
        %v505 = vmax.f32 %v485, 0.0
        %v506 = vmax.f32 %v486, 0.0
        %v507 = vmax.f32 %v487, 0.0
        %v508 = vmax.f32 %v488, 0.0
        %v509 = vmax.f32 %v489, 0.0
        %v510 = vmax.f32 %v490, 0.0
        %v511 = vmax.f32 %v491, 0.0
        %v512 = vmax.f32 %v492, 0.0
        %v513 = vmax.f32 %v493, 0.0
        %v514 = vmax.f32 %v494, 0.0
        %v515 = vmax.f32 %v495, 0.0
        %v516 = vmax.f32 %v496, 0.0
        %v517 = vmax.f32 %v497, 0.0
        %v518 = vmax.f32 %v498, 0.0
        %v519 = vmax.f32 %v499, 0.0
        %v520 = vmax.f32 %v500, 0.0
        %v521 = vmax.f32 %v501, 0.0
        %542 = vrot.lane.b32.xlu0 %v502, 21
        %v543 = vpop.permute.xlu0 %542
        %544 = vrot.lane.b32.xlu0 %v503, 21
        %v545 = vpop.permute.xlu0 %544
        %546 = vrot.lane.b32.xlu0 %v504, 21
        %v547 = vpop.permute.xlu0 %546
        %548 = vrot.lane.b32.xlu0 %v505, 21
        %v549 = vpop.permute.xlu0 %548
        %550 = vrot.lane.b32.xlu0 %v506, 21
        %v551 = vpop.permute.xlu0 %550
        %552 = vrot.lane.b32.xlu0 %v507, 21
        %v553 = vpop.permute.xlu0 %552
        %554 = vrot.lane.b32.xlu0 %v508, 21
        %v555 = vpop.permute.xlu0 %554
        %556 = vrot.lane.b32.xlu0 %v509, 21
        %v557 = vpop.permute.xlu0 %556
        %558 = vrot.lane.b32.xlu0 %v510, 21
        %v559 = vpop.permute.xlu0 %558
        %560 = vrot.lane.b32.xlu0 %v511, 21
        %v561 = vpop.permute.xlu0 %560
        %562 = vrot.lane.b32.xlu0 %v512, 21
        %v563 = vpop.permute.xlu0 %562
        %564 = vrot.lane.b32.xlu0 %v513, 21
        %v565 = vpop.permute.xlu0 %564
        %566 = vrot.lane.b32.xlu0 %v514, 21
        %v567 = vpop.permute.xlu0 %566
        %568 = vrot.lane.b32.xlu0 %v515, 21
        %v569 = vpop.permute.xlu0 %568
        %570 = vrot.lane.b32.xlu0 %v516, 21
        %v571 = vpop.permute.xlu0 %570
        %572 = vrot.lane.b32.xlu0 %v517, 21
        %v573 = vpop.permute.xlu0 %572
        %574 = vrot.lane.b32.xlu0 %v518, 21
        %v575 = vpop.permute.xlu0 %574
        %576 = vrot.lane.b32.xlu0 %v519, 21
        %v577 = vpop.permute.xlu0 %576
        %578 = vrot.lane.b32.xlu0 %v520, 21
        %v579 = vpop.permute.xlu0 %578
        %580 = vrot.lane.b32.xlu0 %v521, 21
        %v581 = vpop.permute.xlu0 %580
        %vm602 = vcmask 433320
        %603 = vst.msk [vmem:[%s247 + $0x20] sm:$0xff] %vm602, %v543
        %604 = vst.msk [vmem:[%s247 + $0x28] sm:$0xff] %vm602, %v545
        %605 = vst.msk [vmem:[%s247 + $0x30] sm:$0xff] %vm602, %v547
        %606 = vst.msk [vmem:[%s247 + $0x38] sm:$0xff] %vm602, %v549
        %607 = vst.msk [vmem:[%s247 + $0x40] sm:$0xff] %vm602, %v551
        %608 = vst.msk [vmem:[%s247 + $0xa0] sm:$0xff] %vm602, %v553
        %609 = vst.msk [vmem:[%s247 + $0xa8] sm:$0xff] %vm602, %v555
        %610 = vst.msk [vmem:[%s247 + $0xb0] sm:$0xff] %vm602, %v557
        %611 = vst.msk [vmem:[%s247 + $0xb8] sm:$0xff] %vm602, %v559
        %612 = vst.msk [vmem:[%s247 + $0xc0] sm:$0xff] %vm602, %v561
        %613 = vst.msk [vmem:[%s247 + $0x120] sm:$0xff] %vm602, %v563
        %614 = vst.msk [vmem:[%s247 + $0x128] sm:$0xff] %vm602, %v565
        %615 = vst.msk [vmem:[%s247 + $0x130] sm:$0xff] %vm602, %v567
        %616 = vst.msk [vmem:[%s247 + $0x138] sm:$0xff] %vm602, %v569
        %617 = vst.msk [vmem:[%s247 + $0x140] sm:$0xff] %vm602, %v571
        %618 = vst.msk [vmem:[%s247 + $0x1a0] sm:$0xff] %vm602, %v573
        %619 = vst.msk [vmem:[%s247 + $0x1a8] sm:$0xff] %vm602, %v575
        %620 = vst.msk [vmem:[%s247 + $0x1b0] sm:$0xff] %vm602, %v577
        %621 = vst.msk [vmem:[%s247 + $0x1b8] sm:$0xff] %vm602, %v579
        %622 = vst.msk [vmem:[%s247 + $0x1c0] sm:$0xff] %vm602, %v581
        %v623 = vld [vmem:[%s267] sm:$0xff]
        %v624 = vld [vmem:[%s267 + $0x8] sm:$0xff]
        %v625 = vld [vmem:[%s267 + $0x10] sm:$0xff]
        %v626 = vld [vmem:[%s267 + $0x18] sm:$0xff]
        %v627 = vld [vmem:[%s267 + $0x20] sm:$0xff]
        %v628 = vld [vmem:[%s267 + $0x28] sm:$0xff]
        %v629 = vld [vmem:[%s267 + $0x30] sm:$0xff]
        %v630 = vld [vmem:[%s267 + $0x38] sm:$0xff]
        %v631 = vld [vmem:[%s267 + $0x40] sm:$0xff]
        %v632 = vld [vmem:[%s267 + $0x48] sm:$0xff]
        %v633 = vld [vmem:[%s267 + $0x50] sm:$0xff]
        %v634 = vld [vmem:[%s267 + $0x58] sm:$0xff]
        %v635 = vld [vmem:[%s267 + $0x60] sm:$0xff]
        %v636 = vld [vmem:[%s267 + $0x68] sm:$0xff]
        %v637 = vld [vmem:[%s267 + $0x70] sm:$0xff]
        %v638 = vld [vmem:[%s267 + $0x78] sm:$0xff]
        %v639 = vld [vmem:[%s267 + $0x80] sm:$0xff]
        %v640 = vld [vmem:[%s267 + $0x88] sm:$0xff]
        %v641 = vld [vmem:[%s267 + $0x90] sm:$0xff]
        %v642 = vld [vmem:[%s267 + $0x98] sm:$0xff]
        %v643 = vld [vmem:[%s247 + $0x20] sm:$0xff]
        %v644 = vld [vmem:[%s247 + $0x28] sm:$0xff]
        %v645 = vld [vmem:[%s247 + $0x30] sm:$0xff]
        %v646 = vld [vmem:[%s247 + $0x38] sm:$0xff]
        %v647 = vld [vmem:[%s247 + $0x40] sm:$0xff]
        %v648 = vld [vmem:[%s247 + $0xa0] sm:$0xff]
        %v649 = vld [vmem:[%s247 + $0xa8] sm:$0xff]
        %v650 = vld [vmem:[%s247 + $0xb0] sm:$0xff]
        %v651 = vld [vmem:[%s247 + $0xb8] sm:$0xff]
        %v652 = vld [vmem:[%s247 + $0xc0] sm:$0xff]
        %v653 = vld [vmem:[%s247 + $0x120] sm:$0xff]
        %v654 = vld [vmem:[%s247 + $0x128] sm:$0xff]
        %v655 = vld [vmem:[%s247 + $0x130] sm:$0xff]
        %v656 = vld [vmem:[%s247 + $0x138] sm:$0xff]
        %v657 = vld [vmem:[%s247 + $0x140] sm:$0xff]
        %v658 = vld [vmem:[%s247 + $0x1a0] sm:$0xff]
        %v659 = vld [vmem:[%s247 + $0x1a8] sm:$0xff]
        %v660 = vld [vmem:[%s247 + $0x1b0] sm:$0xff]
        %v661 = vld [vmem:[%s247 + $0x1b8] sm:$0xff]
        %v662 = vld [vmem:[%s247 + $0x1c0] sm:$0xff]
        %683 = vrot.lane.b32.xlu0 %v623, 47
        %v684 = vpop.permute.xlu0 %683
        %685 = vrot.lane.b32.xlu0 %v624, 47
        %v686 = vpop.permute.xlu0 %685
        %687 = vrot.lane.b32.xlu0 %v625, 47
        %v688 = vpop.permute.xlu0 %687
        %689 = vrot.lane.b32.xlu0 %v626, 47
        %v690 = vpop.permute.xlu0 %689
        %691 = vrot.lane.b32.xlu0 %v627, 47
        %v692 = vpop.permute.xlu0 %691
        %693 = vrot.lane.b32.xlu0 %v628, 47
        %v694 = vpop.permute.xlu0 %693
        %695 = vrot.lane.b32.xlu0 %v629, 47
        %v696 = vpop.permute.xlu0 %695
        %697 = vrot.lane.b32.xlu0 %v630, 47
        %v698 = vpop.permute.xlu0 %697
        %699 = vrot.lane.b32.xlu0 %v631, 47
        %v700 = vpop.permute.xlu0 %699
        %701 = vrot.lane.b32.xlu0 %v632, 47
        %v702 = vpop.permute.xlu0 %701
        %703 = vrot.lane.b32.xlu0 %v633, 47
        %v704 = vpop.permute.xlu0 %703
        %705 = vrot.lane.b32.xlu0 %v634, 47
        %v706 = vpop.permute.xlu0 %705
        %707 = vrot.lane.b32.xlu0 %v635, 47
        %v708 = vpop.permute.xlu0 %707
        %709 = vrot.lane.b32.xlu0 %v636, 47
        %v710 = vpop.permute.xlu0 %709
        %711 = vrot.lane.b32.xlu0 %v637, 47
        %v712 = vpop.permute.xlu0 %711
        %713 = vrot.lane.b32.xlu0 %v638, 47
        %v714 = vpop.permute.xlu0 %713
        %715 = vrot.lane.b32.xlu0 %v639, 47
        %v716 = vpop.permute.xlu0 %715
        %717 = vrot.lane.b32.xlu0 %v640, 47
        %v718 = vpop.permute.xlu0 %717
        %719 = vrot.lane.b32.xlu0 %v641, 47
        %v720 = vpop.permute.xlu0 %719
        %721 = vrot.lane.b32.xlu0 %v642, 47
        %v722 = vpop.permute.xlu0 %721
        %v743 = vmax.f32 %v643, %v684
        %v744 = vmax.f32 %v644, %v686
        %v745 = vmax.f32 %v645, %v688
        %v746 = vmax.f32 %v646, %v690
        %v747 = vmax.f32 %v647, %v692
        %v748 = vmax.f32 %v648, %v694
        %v749 = vmax.f32 %v649, %v696
        %v750 = vmax.f32 %v650, %v698
        %v751 = vmax.f32 %v651, %v700
        %v752 = vmax.f32 %v652, %v702
        %v753 = vmax.f32 %v653, %v704
        %v754 = vmax.f32 %v654, %v706
        %v755 = vmax.f32 %v655, %v708
        %v756 = vmax.f32 %v656, %v710
        %v757 = vmax.f32 %v657, %v712
        %v758 = vmax.f32 %v658, %v714
        %v759 = vmax.f32 %v659, %v716
        %v760 = vmax.f32 %v660, %v718
        %v761 = vmax.f32 %v661, %v720
        %v762 = vmax.f32 %v662, %v722
        %vm763 = vcmask 646520
        %764 = vst.msk [vmem:[%s247 + $0x20] sm:$0xff] %vm763, %v743
        %765 = vst.msk [vmem:[%s247 + $0x28] sm:$0xff] %vm763, %v744
        %766 = vst.msk [vmem:[%s247 + $0x30] sm:$0xff] %vm763, %v745
        %767 = vst.msk [vmem:[%s247 + $0x38] sm:$0xff] %vm763, %v746
        %768 = vst.msk [vmem:[%s247 + $0x40] sm:$0xff] %vm763, %v747
        %769 = vst.msk [vmem:[%s247 + $0xa0] sm:$0xff] %vm763, %v748
        %770 = vst.msk [vmem:[%s247 + $0xa8] sm:$0xff] %vm763, %v749
        %771 = vst.msk [vmem:[%s247 + $0xb0] sm:$0xff] %vm763, %v750
        %772 = vst.msk [vmem:[%s247 + $0xb8] sm:$0xff] %vm763, %v751
        %773 = vst.msk [vmem:[%s247 + $0xc0] sm:$0xff] %vm763, %v752
        %774 = vst.msk [vmem:[%s247 + $0x120] sm:$0xff] %vm763, %v753
        %775 = vst.msk [vmem:[%s247 + $0x128] sm:$0xff] %vm763, %v754
        %776 = vst.msk [vmem:[%s247 + $0x130] sm:$0xff] %vm763, %v755
        %777 = vst.msk [vmem:[%s247 + $0x138] sm:$0xff] %vm763, %v756
        %778 = vst.msk [vmem:[%s247 + $0x140] sm:$0xff] %vm763, %v757
        %779 = vst.msk [vmem:[%s247 + $0x1a0] sm:$0xff] %vm763, %v758
        %780 = vst.msk [vmem:[%s247 + $0x1a8] sm:$0xff] %vm763, %v759
        %781 = vst.msk [vmem:[%s247 + $0x1b0] sm:$0xff] %vm763, %v760
        %782 = vst.msk [vmem:[%s247 + $0x1b8] sm:$0xff] %vm763, %v761
        %783 = vst.msk [vmem:[%s247 + $0x1c0] sm:$0xff] %vm763, %v762
        %v784 = vld [vmem:[%s274] sm:$0xff]
        %v785 = vld [vmem:[%s274 + $0x8] sm:$0xff]
        %v786 = vld [vmem:[%s274 + $0x10] sm:$0xff]
        %v787 = vld [vmem:[%s274 + $0x18] sm:$0xff]
        %v788 = vld [vmem:[%s274 + $0x20] sm:$0xff]
        %v789 = vld [vmem:[%s274 + $0x28] sm:$0xff]
        %v790 = vld [vmem:[%s274 + $0x30] sm:$0xff]
        %v791 = vld [vmem:[%s274 + $0x38] sm:$0xff]
        %v792 = vld [vmem:[%s274 + $0x40] sm:$0xff]
        %v793 = vld [vmem:[%s274 + $0x48] sm:$0xff]
        %v794 = vld [vmem:[%s274 + $0x50] sm:$0xff]
        %v795 = vld [vmem:[%s274 + $0x58] sm:$0xff]
        %v796 = vld [vmem:[%s274 + $0x60] sm:$0xff]
        %v797 = vld [vmem:[%s274 + $0x68] sm:$0xff]
        %v798 = vld [vmem:[%s274 + $0x70] sm:$0xff]
        %v799 = vld [vmem:[%s274 + $0x78] sm:$0xff]
        %v800 = vld [vmem:[%s274 + $0x80] sm:$0xff]
        %v801 = vld [vmem:[%s274 + $0x88] sm:$0xff]
        %v802 = vld [vmem:[%s274 + $0x90] sm:$0xff]
        %v803 = vld [vmem:[%s274 + $0x98] sm:$0xff]
        %v804 = vmax.f32 %v784, 0.0
        %v805 = vmax.f32 %v785, 0.0
        %v806 = vmax.f32 %v786, 0.0
        %v807 = vmax.f32 %v787, 0.0
        %v808 = vmax.f32 %v788, 0.0
        %v809 = vmax.f32 %v789, 0.0
        %v810 = vmax.f32 %v790, 0.0
        %v811 = vmax.f32 %v791, 0.0
        %v812 = vmax.f32 %v792, 0.0
        %v813 = vmax.f32 %v793, 0.0
        %v814 = vmax.f32 %v794, 0.0
        %v815 = vmax.f32 %v795, 0.0
        %v816 = vmax.f32 %v796, 0.0
        %v817 = vmax.f32 %v797, 0.0
        %v818 = vmax.f32 %v798, 0.0
        %v819 = vmax.f32 %v799, 0.0
        %v820 = vmax.f32 %v800, 0.0
        %v821 = vmax.f32 %v801, 0.0
        %v822 = vmax.f32 %v802, 0.0
        %v823 = vmax.f32 %v803, 0.0
        %844 = vrot.lane.b32.xlu0 %v804, 42
        %v845 = vpop.permute.xlu0 %844
        %846 = vrot.lane.b32.xlu0 %v805, 42
        %v847 = vpop.permute.xlu0 %846
        %848 = vrot.lane.b32.xlu0 %v806, 42
        %v849 = vpop.permute.xlu0 %848
        %850 = vrot.lane.b32.xlu0 %v807, 42
        %v851 = vpop.permute.xlu0 %850
        %852 = vrot.lane.b32.xlu0 %v808, 42
        %v853 = vpop.permute.xlu0 %852
        %854 = vrot.lane.b32.xlu0 %v809, 42
        %v855 = vpop.permute.xlu0 %854
        %856 = vrot.lane.b32.xlu0 %v810, 42
        %v857 = vpop.permute.xlu0 %856
        %858 = vrot.lane.b32.xlu0 %v811, 42
        %v859 = vpop.permute.xlu0 %858
        %860 = vrot.lane.b32.xlu0 %v812, 42
        %v861 = vpop.permute.xlu0 %860
        %862 = vrot.lane.b32.xlu0 %v813, 42
        %v863 = vpop.permute.xlu0 %862
        %864 = vrot.lane.b32.xlu0 %v814, 42
        %v865 = vpop.permute.xlu0 %864
        %866 = vrot.lane.b32.xlu0 %v815, 42
        %v867 = vpop.permute.xlu0 %866
        %868 = vrot.lane.b32.xlu0 %v816, 42
        %v869 = vpop.permute.xlu0 %868
        %870 = vrot.lane.b32.xlu0 %v817, 42
        %v871 = vpop.permute.xlu0 %870
        %872 = vrot.lane.b32.xlu0 %v818, 42
        %v873 = vpop.permute.xlu0 %872
        %874 = vrot.lane.b32.xlu0 %v819, 42
        %v875 = vpop.permute.xlu0 %874
        %876 = vrot.lane.b32.xlu0 %v820, 42
        %v877 = vpop.permute.xlu0 %876
        %878 = vrot.lane.b32.xlu0 %v821, 42
        %v879 = vpop.permute.xlu0 %878
        %880 = vrot.lane.b32.xlu0 %v822, 42
        %v881 = vpop.permute.xlu0 %880
        %882 = vrot.lane.b32.xlu0 %v823, 42
        %v883 = vpop.permute.xlu0 %882
        %vm904 = vcmask 736592
        %905 = vst.msk [vmem:[%s247 + $0x50] sm:$0xff] %vm904, %v845
        %906 = vst.msk [vmem:[%s247 + $0x58] sm:$0xff] %vm904, %v847
        %907 = vst.msk [vmem:[%s247 + $0x60] sm:$0xff] %vm904, %v849
        %908 = vst.msk [vmem:[%s247 + $0x68] sm:$0xff] %vm904, %v851
        %909 = vst.msk [vmem:[%s247 + $0x70] sm:$0xff] %vm904, %v853
        %910 = vst.msk [vmem:[%s247 + $0xd0] sm:$0xff] %vm904, %v855
        %911 = vst.msk [vmem:[%s247 + $0xd8] sm:$0xff] %vm904, %v857
        %912 = vst.msk [vmem:[%s247 + $0xe0] sm:$0xff] %vm904, %v859
        %913 = vst.msk [vmem:[%s247 + $0xe8] sm:$0xff] %vm904, %v861
        %914 = vst.msk [vmem:[%s247 + $0xf0] sm:$0xff] %vm904, %v863
        %915 = vst.msk [vmem:[%s247 + $0x150] sm:$0xff] %vm904, %v865
        %916 = vst.msk [vmem:[%s247 + $0x158] sm:$0xff] %vm904, %v867
        %917 = vst.msk [vmem:[%s247 + $0x160] sm:$0xff] %vm904, %v869
        %918 = vst.msk [vmem:[%s247 + $0x168] sm:$0xff] %vm904, %v871
        %919 = vst.msk [vmem:[%s247 + $0x170] sm:$0xff] %vm904, %v873
        %920 = vst.msk [vmem:[%s247 + $0x1d0] sm:$0xff] %vm904, %v875
        %921 = vst.msk [vmem:[%s247 + $0x1d8] sm:$0xff] %vm904, %v877
        %922 = vst.msk [vmem:[%s247 + $0x1e0] sm:$0xff] %vm904, %v879
        %923 = vst.msk [vmem:[%s247 + $0x1e8] sm:$0xff] %vm904, %v881
        %924 = vst.msk [vmem:[%s247 + $0x1f0] sm:$0xff] %vm904, %v883
        %s925 = sand.u32 %s130, 1
        %s926 = scalar_lea.sflag [#allocation3], %s925
        %s927 = sand.u32 %s130, 1
        %s928 = smul.addr %s927, 512
        %s929 = scalar_lea.vmem [#allocation2], %s928
        // Predicated region
        $region37: #{tpu_custom_call.1} parent=35 // pred_check
          %p930 = pneg %p140
        $region38: #{tpu_custom_call.1} parent=35 // pred_check_branch
          %932 = sbr.rel (%p930) target = $region40
        $region39: #{tpu_custom_call.1} parent=35 // pred_region
          %s933 = smul.u32 4, %s18
          %s935 = ssub.s32 8192, 8192
          %936 = vsyncadd %s926, %s935
          %s937 = smul.addr %s933, 16
          %s938 = smul.addr %s937, 128
          %s939 = scalar_lea.hbm %s4, %s938
          %s940 = sshll.u32 %s929, 4
          %s941 = int_to_ptr.vmem [resolvable:$true] %s940
          %946 = dma.vmem_to_hbm [thread:$0]  %s941, 8192, %s939, %s926, 128, 128, 8
        $region40: #{tpu_custom_call.1} parent=35 // pred_fallthru
          _
      $region36: #{tpu_custom_call.1} parent=5 // pred_fallthru
        _
      %p947 = scmp.le.s32.totalorder 2, %s13
      // Predicated region
      $region41: #{tpu_custom_call.1} parent=5 // pred_check
        %p948 = pneg %p947
      $region42: #{tpu_custom_call.1} parent=5 // pred_check_branch
        %950 = sbr.rel (%p948) target = $region44
      $region43: #{tpu_custom_call.1} parent=5 // pred_region
        %s951 = ssub.s32 %s13, 2
        // Predicated region
        $region45: #{tpu_custom_call.1} parent=43 // pred_check
          %p952 = pneg %p146
        $region46: #{tpu_custom_call.1} parent=43 // pred_check_branch
          %954 = sbr.rel (%p952) target = $region48
        $region47: #{tpu_custom_call.1} parent=43 // pred_region
          %s955 = sand.u32 %s131, 1
          %s956 = scalar_lea.sflag [#allocation3], %s955
          %s957 = sand.u32 %s131, 1
          %s958 = smul.addr %s957, 512
          %s959 = scalar_lea.vmem [#allocation2], %s958
          %960 = dma.done %s956, 8192
        $region48: #{tpu_custom_call.1} parent=43 // pred_fallthru
          _
      $region44: #{tpu_custom_call.1} parent=5 // pred_fallthru
        _
    $region6: #{tpu_custom_call.1} parent=1 // loop_footer
      %s17 = sadd.s32 1, %s13
    $region7: #{tpu_custom_call.1} parent=1 // loop_footer_branch
      %12 = sbr.rel target = $region3
    $region8: #{tpu_custom_call.1} parent=1 // loop_exit
      _
    %961 = vsyncpa [#allocation3], 1
    %s962 = scalar_lea.sflag [#allocation3], 1
    %963 = vsyncpa %s962, 1

</llo_original>
